<compile_context>
chip_gen: v5e
topology: v5e:2x2
jax: 0.10.0
libtpu: 0.0.40
codegen_flags: <defaults>
</compile_context>

<pallas_src>
import jax
import jax.numpy as jnp
from jax.experimental import pallas as pl
from jax.experimental.pallas import tpu as pltpu

FILTER_ORDER = 6                     # -> filter_order + 1 = 7 coefficients
_NUM_COEFFS = FILTER_ORDER + 1
_LANES = 128                         # lane width
_SMALL_MAX_ROWS = 2048               # <= 1 MiB: single fused block, in-kernel max
_MAX_BLOCK_ROWS = 2048               # 1 MiB tiles for the streaming (large-n) path

_FILTER_PATTERNS = {
    "smooth":      [1.0, -0.5,  0.1,    -0.02,  0.004,  -0.0008, 0.00015],
    "butterworth": [1.0, -0.6,  0.2,    -0.05,  0.01,   -0.002,  0.0003],
    "gaussian":    [1.0, -0.7,  0.15,   -0.03,  0.005,  -0.0007, 8e-05],
    "golden_036":  [1.0, -0.36, 0.1296, -0.22,  0.1564, -0.088,  0.0548],
}

# Chebyshev (T0..T6) -> monomial (x^0..x^6) basis change: mono = M @ cheb.
_CHEB_TO_MONO_ROWS = (
    (1.0, 0.0, -1.0,  0.0,  1.0,   0.0,  -1.0),
    (0.0, 1.0,  0.0, -3.0,  0.0,   5.0,   0.0),
    (0.0, 0.0,  2.0,  0.0, -8.0,   0.0,  18.0),
    (0.0, 0.0,  0.0,  4.0,  0.0, -20.0,   0.0),
    (0.0, 0.0,  0.0,  0.0,  8.0,   0.0, -48.0),
    (0.0, 0.0,  0.0,  0.0,  0.0,  16.0,   0.0),
    (0.0, 0.0,  0.0,  0.0,  0.0,   0.0,  32.0),
)


def _get_filter_coefficients(name, order):
    coeffs = list(_FILTER_PATTERNS.get(name, _FILTER_PATTERNS["smooth"]))
    if len(coeffs) > order + 1:
        coeffs = coeffs[: order + 1]
    elif len(coeffs) < order + 1:
        coeffs = coeffs + [0.0] * (order + 1 - len(coeffs))
    return jnp.asarray(coeffs, dtype=jnp.float32)


def _horner_sigmoid(coeffs_ref, x):
    """sigmoid(sum_j coeffs[j] * x^j) + 1e-6 via Horner + native EUP tanh.

    coeffs_ref is an SMEM ref whose first 7 entries are monomial coefficients
    m0..m6 (ascending powers).  Horner: 6 mul + 6 add VALU ops per element."""
    r = coeffs_ref[FILTER_ORDER] * x + coeffs_ref[FILTER_ORDER - 1]
    for j in range(FILTER_ORDER - 2, -1, -1):
        r = r * x + coeffs_ref[j]
    # sigmoid(z) == 0.5 * tanh(0.5 * z) + 0.5 ; tanh is a single EUP op.
    return 0.5 * jnp.tanh(0.5 * r) + (0.5 + 1e-6)


def _fused_small_kernel(coeffs_ref, ev_ref, out_ref):
    """Whole problem in one VMEM block: global max + rescale + filter fused.

    coeffs_ref: SMEM (7,) f32 monomial coefficients.
    ev_ref/out_ref: VMEM (rows, 128) f32; padding lanes of ev hold -inf."""
    ev = ev_ref[...]
    row_max = jnp.max(ev, axis=1, keepdims=True)              # (rows, 1)
    max_ev = jnp.max(row_max, axis=0, keepdims=True) + 1e-8    # (1, 1)
    x = ev * (2.0 / max_ev) - 1.0                              # rescale to [-1, 1]
    out_ref[...] = _horner_sigmoid(coeffs_ref, x)


def _tiled_kernel(params_ref, ev_ref, out_ref):
    """Streaming path.  params_ref: SMEM (8,) f32 = [m0..m6, 2/(max+1e-8)]."""
    x = ev_ref[...] * params_ref[_NUM_COEFFS] - 1.0
    out_ref[...] = _horner_sigmoid(params_ref, x)


@jax.jit
def enhanced_spectral_basis_filter(eigenvalues, mixing_weights,
                                   refinement_coeffs, refinement_scale):
    """JAX/Pallas equivalent of EnhancedSpectralBasisFilter.forward."""
    # --- parameter glue (tiny: 3- and 7-element vectors, traced constants) ---
    # TODO(synk): the softmax/mixing could be fused onto the kernel's idle
    # scalar unit, but scalar-exp lowering is not reliably supported; kept in
    # the wrapper for robustness (it touches no HBM-sized data).
    weights = jax.nn.softmax(mixing_weights)                       # (3,)
    bank = jnp.stack([
        _get_filter_coefficients("golden_036", FILTER_ORDER),
        _get_filter_coefficients("smooth", FILTER_ORDER),
        _get_filter_coefficients("butterworth", FILTER_ORDER),
    ])                                                             # (3, 7)
    cheb = weights @ bank + refinement_scale * refinement_coeffs   # (7,)
    cheb_to_mono = jnp.asarray(_CHEB_TO_MONO_ROWS, dtype=jnp.float32)
    mono = cheb_to_mono @ cheb.astype(jnp.float32)                 # (7,) monomial

    ev = eigenvalues.astype(jnp.float32)
    n = ev.shape[0]
    rows = -(-n // _LANES)                  # ceil(n / 128)
    padded_n = rows * _LANES
    cost = pl.CostEstimate(flops=20 * padded_n, transcendentals=padded_n,
                           bytes_accessed=8 * padded_n)

    if rows <= _SMALL_MAX_ROWS:
        # Fully fused single-block path: the global max is computed in-kernel,
        # so this is exactly one HBM read + one HBM write of the vector.
        # (Deliberate trade-off vs. splitting across both v7x TCs: at these
        # sizes op-launch overhead and HBM passes dominate, not VALU.)
        if padded_n != n:
            ev = jnp.pad(ev, (0, padded_n - n), constant_values=-jnp.inf)
        ev2d = ev.reshape(rows, _LANES)     # sublane-dense layout
        out = pl.pallas_call(
            _fused_small_kernel,
            out_shape=jax.ShapeDtypeStruct((rows, _LANES), jnp.float32),
            grid=(1,),
            in_specs=[
                pl.BlockSpec(memory_space=pltpu.SMEM),              # mono coeffs
                pl.BlockSpec((rows, _LANES), lambda i: (0, 0)),     # eigenvalues
            ],
            out_specs=pl.BlockSpec((rows, _LANES), lambda i: (0, 0)),
            cost_estimate=cost,
        )(mono, ev2d)
    else:
        # Streaming path: hoist the max (one extra HBM read) so every tile is
        # independent, then grid over 1 MiB row-tiles, parallel across cores.
        max_ev = jnp.max(ev) + 1e-8
        params = jnp.concatenate([mono, jnp.reshape(2.0 / max_ev, (1,))])  # (8,)
        if padded_n != n:
            ev = jnp.pad(ev, (0, padded_n - n))   # max already taken: no effect
        ev2d = ev.reshape(rows, _LANES)
        # Block: <= _MAX_BLOCK_ROWS, and never fewer than 2 grid steps so the
        # "parallel" axis actually spans both TensorCores on v7x.
        half_rows = ((rows + 1) // 2 + 7) // 8 * 8
        block_rows = min(_MAX_BLOCK_ROWS, half_rows)
        grid = (-(-rows // block_rows),)          # ragged final block is OK
        out = pl.pallas_call(
            _tiled_kernel,
            out_shape=jax.ShapeDtypeStruct((rows, _LANES), jnp.float32),
            grid=grid,
            in_specs=[
                pl.BlockSpec(memory_space=pltpu.SMEM),                  # params
                pl.BlockSpec((block_rows, _LANES), lambda i: (i, 0)),   # eigvals
            ],
            out_specs=pl.BlockSpec((block_rows, _LANES), lambda i: (i, 0)),
            compiler_params=pltpu.CompilerParams(
                dimension_semantics=("parallel",)),
            cost_estimate=cost,
        )(params, ev2d)

    out_flat = out.reshape(padded_n)
    return out_flat if padded_n == n else out_flat[:n]


def _reference(eigenvalues, mixing_weights, refinement_coeffs, refinement_scale):
    """Pure-JAX reference mirroring the PyTorch forward."""
    weights = jax.nn.softmax(mixing_weights)
    bank = jnp.stack([
        _get_filter_coefficients("golden_036", FILTER_ORDER),
        _get_filter_coefficients("smooth", FILTER_ORDER),
        _get_filter_coefficients("butterworth", FILTER_ORDER),
    ])
    final_coeffs = weights @ bank + refinement_scale * refinement_coeffs
    max_ev = jnp.max(eigenvalues) + 1e-8
    x = 2.0 * (eigenvalues / max_ev) - 1.0
    result = final_coeffs[0] * jnp.ones_like(x)
    t_prev, t_curr = jnp.ones_like(x), x
    result = result + final_coeffs[1] * t_curr
    for i in range(2, FILTER_ORDER + 1):
        t_next = 2.0 * x * t_curr - t_prev
        result = result + final_coeffs[i] * t_next
        t_prev, t_curr = t_curr, t_next
    return jax.nn.sigmoid(result) + 1e-6


if __name__ == "__main__":
    key = jax.random.PRNGKey(0)

    # Deterministic parameter init (matches the module's __init__):
    mixing_weights = jnp.ones((3,), dtype=jnp.float32) / 3.0
    refinement_coeffs = jnp.zeros((FILTER_ORDER + 1,), dtype=jnp.float32)
    refinement_scale = jnp.float32(0.1)

    # Example input: 1000 non-negative graph-Laplacian-style eigenvalues
    # (deliberately not a multiple of 128 to exercise the padding path).
    eigenvalues = jax.random.uniform(key, (1000,), dtype=jnp.float32) * 2.0

    out = enhanced_spectral_basis_filter(
        eigenvalues, mixing_weights, refinement_coeffs, refinement_scale)
    out = jax.block_until_ready(out)

    ref = _reference(eigenvalues, mixing_weights, refinement_coeffs,
                     refinement_scale)
    assert out.shape == eigenvalues.shape
    assert jnp.allclose(out, ref, atol=2e-5, rtol=2e-5), "mismatch vs reference"

    print("KERNEL_OK")
</pallas_src>

<mosaic_0001>
module attributes {stable_mosaic.version = 11 : i64} {
  func.func @_fused_small_kernel(%arg0: i32, %arg1: memref<7xf32, #tpu.memory_space<smem>>, %arg2: memref<8x128xf32, #tpu.memory_space<vmem>>, %arg3: memref<8x128xf32, #tpu.memory_space<vmem>>) attributes {dimension_semantics = [#tpu.dimension_semantics<arbitrary>], iteration_bounds = array<i64: 1>, scalar_prefetch = 0 : i64, scratch_operands = 0 : i64, tpu.core_type = #tpu.core_type<tc>, window_params = [{transform_indices = @transform_0, window_bounds = array<i64: 7>}, {pipeline_mode = #tpu.pipeline_mode<synchronous>, transform_indices = @transform_1, window_bounds = array<i64: 8, 128>}, {pipeline_mode = #tpu.pipeline_mode<synchronous>, transform_indices = @transform_2, window_bounds = array<i64: 8, 128>}]} {
    %c0 = arith.constant 0 : index
    %c0_0 = arith.constant 0 : index
    %0 = vector.load %arg2[%c0, %c0_0] : memref<8x128xf32, #tpu.memory_space<vmem>>, vector<8x128xf32>
    %cst = arith.constant dense<0xFF800000> : vector<8xf32>
    %1 = vector.multi_reduction <maximumf>, %0, %cst [1] : vector<8x128xf32> to vector<8xf32>
    %2 = vector.shape_cast %1 : vector<8xf32> to vector<8x1xf32>
    %cst_1 = arith.constant dense<0xFF800000> : vector<1xf32>
    %3 = vector.multi_reduction <maximumf>, %2, %cst_1 [0] : vector<8x1xf32> to vector<1xf32>
    %4 = vector.shape_cast %3 : vector<1xf32> to vector<1x1xf32>
    %cst_2 = arith.constant 9.99999993E-9 : f32
    %5 = vector.broadcast %cst_2 : f32 to vector<1x1xf32>
    %6 = arith.addf %4, %5 : vector<1x1xf32>
    %cst_3 = arith.constant 2.000000e+00 : f32
    %7 = vector.broadcast %cst_3 : f32 to vector<1x1xf32>
    %8 = arith.divf %7, %6 : vector<1x1xf32>
    %9 = vector.broadcast %8 : vector<1x1xf32> to vector<8x128xf32>
    %10 = arith.mulf %0, %9 : vector<8x128xf32>
    %cst_4 = arith.constant 1.000000e+00 : f32
    %11 = vector.broadcast %cst_4 : f32 to vector<8x128xf32>
    %12 = arith.subf %10, %11 : vector<8x128xf32>
    %c6 = arith.constant 6 : index
    %13 = memref.load %arg1[%c6] : memref<7xf32, #tpu.memory_space<smem>>
    %14 = vector.broadcast %13 : f32 to vector<8x128xf32>
    %15 = arith.mulf %14, %12 : vector<8x128xf32>
    %c5 = arith.constant 5 : index
    %16 = memref.load %arg1[%c5] : memref<7xf32, #tpu.memory_space<smem>>
    %17 = vector.broadcast %16 : f32 to vector<8x128xf32>
    %18 = arith.addf %15, %17 : vector<8x128xf32>
    %19 = arith.mulf %18, %12 : vector<8x128xf32>
    %c4 = arith.constant 4 : index
    %20 = memref.load %arg1[%c4] : memref<7xf32, #tpu.memory_space<smem>>
    %21 = vector.broadcast %20 : f32 to vector<8x128xf32>
    %22 = arith.addf %19, %21 : vector<8x128xf32>
    %23 = arith.mulf %22, %12 : vector<8x128xf32>
    %c3 = arith.constant 3 : index
    %24 = memref.load %arg1[%c3] : memref<7xf32, #tpu.memory_space<smem>>
    %25 = vector.broadcast %24 : f32 to vector<8x128xf32>
    %26 = arith.addf %23, %25 : vector<8x128xf32>
    %27 = arith.mulf %26, %12 : vector<8x128xf32>
    %c2 = arith.constant 2 : index
    %28 = memref.load %arg1[%c2] : memref<7xf32, #tpu.memory_space<smem>>
    %29 = vector.broadcast %28 : f32 to vector<8x128xf32>
    %30 = arith.addf %27, %29 : vector<8x128xf32>
    %31 = arith.mulf %30, %12 : vector<8x128xf32>
    %c1 = arith.constant 1 : index
    %32 = memref.load %arg1[%c1] : memref<7xf32, #tpu.memory_space<smem>>
    %33 = vector.broadcast %32 : f32 to vector<8x128xf32>
    %34 = arith.addf %31, %33 : vector<8x128xf32>
    %35 = arith.mulf %34, %12 : vector<8x128xf32>
    %c0_5 = arith.constant 0 : index
    %36 = memref.load %arg1[%c0_5] : memref<7xf32, #tpu.memory_space<smem>>
    %37 = vector.broadcast %36 : f32 to vector<8x128xf32>
    %38 = arith.addf %35, %37 : vector<8x128xf32>
    %cst_6 = arith.constant 5.000000e-01 : f32
    %39 = vector.broadcast %cst_6 : f32 to vector<8x128xf32>
    %40 = arith.mulf %39, %38 : vector<8x128xf32>
    %41 = math.tanh %40 : vector<8x128xf32>
    %cst_7 = arith.constant 5.000000e-01 : f32
    %42 = vector.broadcast %cst_7 : f32 to vector<8x128xf32>
    %43 = arith.mulf %42, %41 : vector<8x128xf32>
    %cst_8 = arith.constant 5.000010e-01 : f32
    %44 = vector.broadcast %cst_8 : f32 to vector<8x128xf32>
    %45 = arith.addf %43, %44 : vector<8x128xf32>
    %c0_9 = arith.constant 0 : index
    %c0_10 = arith.constant 0 : index
    %46 = vector.load %arg3[%c0_9, %c0_10] : memref<8x128xf32, #tpu.memory_space<vmem>>, vector<8x128xf32>
    tpu.vector_store %arg3[%c0_9, %c0_10], %45 {strides = array<i32>} : memref<8x128xf32, #tpu.memory_space<vmem>>, vector<8x128xf32>,
    return
  }
  func.func @transform_0(%arg0: i32) -> i32 {
    %c0_i32 = arith.constant 0 : i32
    %c0_i32_0 = arith.constant 0 : i32
    return %c0_i32 : i32
  }
  func.func @transform_1(%arg0: i32) -> (i32, i32) {
    %c0_i32 = arith.constant 0 : i32
    %c0_i32_0 = arith.constant 0 : i32
    %c0_i32_1 = arith.constant 0 : i32
    return %c0_i32, %c0_i32_0 : i32, i32
  }
  func.func @transform_2(%arg0: i32) -> (i32, i32) {
    %c0_i32 = arith.constant 0 : i32
    %c0_i32_0 = arith.constant 0 : i32
    %c0_i32_1 = arith.constant 0 : i32
    return %c0_i32, %c0_i32_0 : i32, i32
  }
}

</mosaic_0001>

<llo_original>
// kernel: enhanced_spectral_basis_filter.1
$region0: #{enhanced_spectral_basis_filter.1}
  #allocation0 [shape = 'u32[]', space=smem, size = 0x4, offset = 0x4, fixed_abs, tag = 'smem constant byte address 0x4 - core index']
  #allocation1 [shape = 'u32[72,128]{1,0:T(1,128)}', space=vmem, size = 0x9000, scoped, tag = 'internal scratch']
  %s0 = inlined_call_operand.vmem [shape: f32[7], index: 0, kind: input, shape index: {}]
  %s1 = inlined_call_operand.vmem [shape: f32[8,128], index: 1, kind: input, shape index: {}]
  %s2 = inlined_call_operand.hbm [shape: f32[8,128], index: 2, kind: output, shape index: {}]
  %s3 = sld [smem:[#allocation0]]
  $region22: #{enhanced_spectral_basis_filter.1} parent=0
    _
  %s5 = ssub.s32 1, %s3
  %s6 = scalar_select 0, %s5, %s3
  $region1: #{enhanced_spectral_basis_filter.1} parent=0
    #allocation2 [shape = 'u8[512]{0}', space=smem, size = 0x200, scoped, tag = 'input window, operand 0, single buffered']
    #allocation3 [shape = 's32[1]{0}', space=sflag, size = 0x4, scoped, tag = 'scoped memory for enhanced_spectral_basis_filter.1']
    #allocation4 [shape = 's32[1]{0}', space=sflag, size = 0x4, scoped, tag = 'scoped memory for enhanced_spectral_basis_filter.1']
    #allocation5 [shape = 'u8[4096]{0}', space=vmem, size = 0x1000, scoped, tag = 'output window, operand 0, single buffered']
    %7 = vsyncpa [#allocation4], 0
    %8 = vsyncpa [#allocation3], 0
    // Predicated region
    $region2: #{enhanced_spectral_basis_filter.1} parent=1 // pred_check
      _
    $region3: #{enhanced_spectral_basis_filter.1} parent=1 // pred_check_branch
      %10 = sbr.rel (0) target = $region5
    $region4: #{enhanced_spectral_basis_filter.1} parent=1 // pred_region
      %12 = vsyncadd [#allocation4], 0
      %s14 = sshll.u32 %s0, 4
      %s15 = int_to_ptr.vmem [resolvable:$true] %s14
      %17 = dma.vmem_to_smem %s15, 16, [#allocation2], [#allocation4]
    $region5: #{enhanced_spectral_basis_filter.1} parent=1 // pred_fallthru
      _
    // Predicated region
    $region6: #{enhanced_spectral_basis_filter.1} parent=1 // pred_check
      _
    $region7: #{enhanced_spectral_basis_filter.1} parent=1 // pred_check_branch
      %19 = sbr.rel (0) target = $region9
    $region8: #{enhanced_spectral_basis_filter.1} parent=1 // pred_region
      _
    $region9: #{enhanced_spectral_basis_filter.1} parent=1 // pred_fallthru
      _
    // Predicated region
    $region10: #{enhanced_spectral_basis_filter.1} parent=1 // pred_check
      _
    $region11: #{enhanced_spectral_basis_filter.1} parent=1 // pred_check_branch
      %21 = sbr.rel (0) target = $region13
    $region12: #{enhanced_spectral_basis_filter.1} parent=1 // pred_region
      %23 = dma.done [#allocation4], 16
    $region13: #{enhanced_spectral_basis_filter.1} parent=1 // pred_fallthru
      _
    %24 = sfence
    %v25 = vld [vmem:[%s1] sm:$0xff]
    %26 = vmax.xlane.f32.xlu0 %v25
    %v27 = vpop.xlane.xlu0 %26
    %v28 = vrot.slane %v27, 4
    %v29 = vmax.f32 %v27, %v28
    %v30 = vrot.slane %v29, 2
    %v31 = vmax.f32 %v29, %v30
    %v32 = vrot.slane %v31, 1
    %v33 = vmax.f32 %v31, %v32
    %v34 = vadd.f32 %v33, 1e-08
    %v35 = vrcp.pop %v34
    %v36 = vmul.f32 %v34, %v35
    %v37 = vsub.f32 1.0, %v36
    %v38 = vmul.f32 %v35, %v37
    %v39 = vadd.f32 %v35, %v38
    %vm40 = vweird.f32 %v34
    %vm41 = vweird.f32 %v35
    %vm42 = vmor %vm40, %vm41
    %v43 = vsel %vm42, %v35, %v39
    %v44 = vand.u32 2147483647, %v34
    %vm45 = vcmp.eq.f32.partialorder %v44, 8.507059e+37
    %v46 = vand.u32 %v34, 2147483648
    %v47 = vor.u32 1.1754944e-38, %v46
    %v48 = vsel %vm45, %v47, %v43
    %v49 = vmul.f32 2.0, %v48
    %v50 = vmul.f32 %v25, %v49
    %v51 = vsub.f32 %v50, 1.0
    %s52 = sld [smem:[#allocation2 + $0x6]]
    %v53 = vstv %s52
    %v54 = vmul.f32 %v53, %v51
    %s55 = sld [smem:[#allocation2 + $0x5]]
    %v56 = vstv %s55
    %v57 = vadd.f32 %v54, %v56
    %v58 = vmul.f32 %v57, %v51
    %s59 = sld [smem:[#allocation2 + $0x4]]
    %v60 = vstv %s59
    %v61 = vadd.f32 %v58, %v60
    %v62 = vmul.f32 %v61, %v51
    %s63 = sld [smem:[#allocation2 + $0x3]]
    %v64 = vstv %s63
    %v65 = vadd.f32 %v62, %v64
    %v66 = vmul.f32 %v65, %v51
    %s67 = sld [smem:[#allocation2 + $0x2]]
    %v68 = vstv %s67
    %v69 = vadd.f32 %v66, %v68
    %v70 = vmul.f32 %v69, %v51
    %s71 = sld [smem:[#allocation2 + $0x1]]
    %v72 = vstv %s71
    %v73 = vadd.f32 %v70, %v72
    %v74 = vmul.f32 %v73, %v51
    %s75 = sld [smem:[#allocation2]]
    %v76 = vstv %s75
    %v77 = vadd.f32 %v74, %v76
    %v78 = vmul.f32 %v77, 0.5
    %v79 = vtanh.pop %v78
    %v80 = vmul.f32 %v79, 0.5
    %v81 = vadd.f32 %v80, 0.500001
    %82 = vst [vmem:[#allocation5] sm:$0xff] %v81
    // Predicated region
    $region14: #{enhanced_spectral_basis_filter.1} parent=1 // pred_check
      _
    $region15: #{enhanced_spectral_basis_filter.1} parent=1 // pred_check_branch
      %84 = sbr.rel (0) target = $region17
    $region16: #{enhanced_spectral_basis_filter.1} parent=1 // pred_region
      %86 = vsyncadd [#allocation3], 0
      %s88 = sshll.u32 [#allocation5], 4
      %s89 = int_to_ptr.vmem [resolvable:$true] %s88
      %s90 = sshll.u32 %s2, 4
      %s91 = int_to_ptr.hbm [resolvable:$true] %s90
      %93 = dma.vmem_to_hbm [thread:$0]  %s89, 128, %s91, [#allocation3]
    $region17: #{enhanced_spectral_basis_filter.1} parent=1 // pred_fallthru
      _
    // Predicated region
    $region18: #{enhanced_spectral_basis_filter.1} parent=1 // pred_check
      _
    $region19: #{enhanced_spectral_basis_filter.1} parent=1 // pred_check_branch
      %95 = sbr.rel (0) target = $region21
    $region20: #{enhanced_spectral_basis_filter.1} parent=1 // pred_region
      %97 = dma.done [#allocation3], 128
    $region21: #{enhanced_spectral_basis_filter.1} parent=1 // pred_fallthru
      _
    %98 = vsyncpa [#allocation3], 1
    %99 = vsyncpa [#allocation4], 1

</llo_original>
